<compile_context>
chip_gen: v7x
topology: tpu7x:2x2x1
jax: 0.10.0
libtpu: 0.0.40
codegen_flags: <defaults>
</compile_context>

<pallas_src>
import functools
import math

import jax
import jax.numpy as jnp
from jax.experimental import pallas as pl
from jax.experimental.pallas import tpu as pltpu


def _pe_kernel(x_ref, o_ref, enc_ref, *, start, max_len, d, block_rows):
    # x_ref / o_ref: (TR, W) block (batch dim squeezed).
    # enc_ref: (TR, W) VMEM scratch, persistent across grid steps.
    tr, w = x_ref.shape

    # Program ids read at kernel top level (NOT inside the pl.when branch) so
    # they resolve under both Mosaic and the TPU interpreter.
    tile_idx = pl.program_id(0)
    batch_idx = pl.program_id(1)

    @pl.when(batch_idx == 0)
    def _build_table():
        row0 = tile_idx * block_rows                       # global first row of tile
        r = jax.lax.broadcasted_iota(jnp.int32, (tr, w), 0)
        c = jax.lax.broadcasted_iota(jnp.int32, (1, w), 1)
        if w == d:
            # Direct layout: each block row is one sequence position.
            col = c                                        # (1, w) feature index
            pos = (row0 + r).astype(jnp.float32)           # (tr, w) position index
        else:
            # Lane-dense flattened layout: w == 128 and d | 128 (d power of 2).
            ppr = w // d                                   # positions per 128-lane row
            shift = d.bit_length() - 1                     # log2(d)
            col = c & (d - 1)                              # (1, w)
            lane_pos = c >> shift                          # (1, w)
            pos = ((row0 + r) * ppr + lane_pos).astype(jnp.float32)

        pair = (col >> 1).astype(jnp.float32)              # k = col // 2
        inv_freq = jnp.exp(pair * jnp.float32(-2.0 * math.log(max_len) / d))
        # Odd columns get a +pi/2 phase: sin(a + pi/2) == cos(a).
        phase = jnp.where((col & 1) == 0, jnp.float32(0.0),
                          jnp.float32(math.pi / 2.0))
        angle = (pos + jnp.float32(start)) * inv_freq + phase
        enc_ref[...] = jnp.sin(angle).astype(enc_ref.dtype)

    # Steady state: pure streaming add (VPU), HBM-roofline bound.
    o_ref[...] = x_ref[...] + enc_ref[...]


def _choose_tile_rows(num_rows, row_bytes, target_block_bytes):
    """Rows per block: multiple of 8, ~target_block_bytes per block.

    Prefers a tile that divides num_rows exactly, but never shrinks below half
    the target to find a divisor -- one partial tail tile is far cheaper than
    making every tile small.
    """
    max_rows = max(8, (target_block_bytes // max(row_bytes, 1)) // 8 * 8)
    if num_rows <= max_rows:
        return num_rows
    floor_rows = max(8, (max_rows // 2) // 8 * 8)
    tr = max_rows
    while tr >= floor_rows:
        if num_rows % tr == 0:
            return tr
        tr -= 8
    return max_rows                                        # accept a partial tail tile


def _launch(x3, *, d, start, max_len, tile_rows, target_block_bytes):
    B, R, W = x3.shape
    itemsize = jnp.dtype(x3.dtype).itemsize

    if tile_rows is None:
        tr = _choose_tile_rows(R, W * itemsize, target_block_bytes)
    else:
        tr = min(int(tile_rows), R)
        if tr < R:
            tr = max(8, (tr // 8) * 8)                     # keep the (8, 128) block rule

    num_tiles = pl.cdiv(R, tr)
    # v7x megacore: ensure the "parallel" axis has >= 2 tiles when the whole
    # (flattened) sequence would otherwise fit in a single tile.
    if num_tiles == 1 and B >= 2 and R >= 16:
        tr = ((((R + 1) // 2) + 7) // 8) * 8
        num_tiles = pl.cdiv(R, tr)

    block_bytes = tr * W * itemsize
    # ~5-block working set: 2x double-buffered input + 2x output + enc scratch.
    vmem_limit = int(min(56 * 2**20, max(32 * 2**20, 6 * block_bytes)))

    kernel = functools.partial(_pe_kernel, start=start, max_len=max_len,
                               d=d, block_rows=tr)

    cost = pl.CostEstimate(
        flops=B * R * W + num_tiles * tr * W * 4,          # streaming add + table build
        transcendentals=num_tiles * (tr * W + W),          # sin table + exp freq row
        bytes_accessed=2 * B * R * W * itemsize,           # stream x in, out
    )

    # TODO(synk): for small B on v7x, the per-tile table build could be
    # overlapped with a 2-slot enc scratch; skipped here for simplicity.
    return pl.pallas_call(
        kernel,
        out_shape=jax.ShapeDtypeStruct((B, R, W), x3.dtype),
        grid_spec=pltpu.PrefetchScalarGridSpec(
            num_scalar_prefetch=0,
            # Batch innermost so the cached table is reused across the batch;
            # row tiles outermost and "parallel" for megacore sharding.
            grid=(num_tiles, B),
            in_specs=[pl.BlockSpec((None, tr, W), lambda l, b: (b, l, 0))],
            out_specs=pl.BlockSpec((None, tr, W), lambda l, b: (b, l, 0)),
            scratch_shapes=[pltpu.VMEM((tr, W), x3.dtype)],
        ),
        compiler_params=pltpu.CompilerParams(
            dimension_semantics=("parallel", "arbitrary"),
            vmem_limit_bytes=vmem_limit,
        ),
        cost_estimate=cost,
    )(x3)


def position_encoding(x, start=0, max_len=10000, *, tile_rows=None,
                      target_block_bytes=4 * 1024 * 1024):
    """x: (B, L, D). Returns x + sinusoidal positional encoding (PyTorch layout)."""
    B, L, D = x.shape
    if D % 2 != 0:
        raise ValueError("feature dimension must be even")

    common = dict(start=start, max_len=max_len, tile_rows=tile_rows,
                  target_block_bytes=target_block_bytes)

    if D % 128 == 0:
        # Already lane-dense.
        return _launch(x, d=D, **common)

    if (128 % D == 0) and ((L * D) % 128 == 0):
        # Small power-of-two D: present a lane-dense (..., 128) slab so output
        # stores are unmasked full-lane vst (biggest measured lever for small D).
        rows = (L * D) // 128
        out = _launch(x.reshape(B, rows, 128), d=D, **common)
        return out.reshape(B, L, D)

    # TODO(synk): for other D not a multiple of 128, pad D in the wrapper to keep
    # stores lane-dense; this fallback uses masked partial stores but is correct.
    return _launch(x, d=D, **common)


def _reference(x, start=0, max_len=10000):
    """Pure-JAX reference mirroring the PyTorch forward exactly."""
    B, L, D = x.shape
    pos = (jnp.arange(start, start + L, dtype=jnp.float32)[:, None]
           / (max_len ** (2.0 * jnp.arange(D // 2, dtype=jnp.float32)[None, :] / D)))
    enc = jnp.zeros((L, D), dtype=x.dtype)
    enc = enc.at[:, ::2].set(jnp.sin(pos).astype(x.dtype))
    enc = enc.at[:, 1::2].set(jnp.cos(pos).astype(x.dtype))
    return x + enc[None, :, :]


def _check(out, ref, name):
    assert out.shape == ref.shape, name
    assert jnp.allclose(out, ref, atol=1e-4, rtol=1e-4), f"mismatch vs reference ({name})"


if __name__ == "__main__":
    key = jax.random.PRNGKey(0)
    k1, k2, k3, k4 = jax.random.split(key, 4)

    # Case 1: small D (32) -> lane-dense flattened path, single tile.
    x1 = jax.random.normal(k1, (2, 8, 32), dtype=jnp.float32)
    o1 = jax.block_until_ready(position_encoding(x1))
    _check(o1, _reference(x1), "flattened, single tile")

    # Case 2: flattened path, multiple row tiles + partial tail tile + start != 0.
    x2 = jax.random.normal(k2, (2, 40, 32), dtype=jnp.float32)
    o2 = jax.block_until_ready(position_encoding(x2, start=5, tile_rows=8))
    _check(o2, _reference(x2, start=5), "flattened, tiled, start=5")

    # Case 3: D multiple of 128 -> direct layout; exercises the 2-tile megacore split.
    x3 = jax.random.normal(k3, (2, 16, 128), dtype=jnp.float32)
    o3 = jax.block_until_ready(position_encoding(x3))
    _check(o3, _reference(x3), "direct, D=128")

    # Case 4: D even but not lane-friendly (48) -> masked-store fallback path.
    x4 = jax.random.normal(k4, (2, 8, 48), dtype=jnp.float32)
    o4 = jax.block_until_ready(position_encoding(x4, start=3))
    _check(o4, _reference(x4, start=3), "fallback, D=48")

    print("KERNEL_OK")
</pallas_src>

<mosaic_0001>
module attributes {stable_mosaic.version = 11 : i64} {
  func.func @_pe_kernel(%arg0: i32, %arg1: i32, %arg2: memref<1x2x128xf32, #tpu.memory_space<vmem>>, %arg3: memref<1x2x128xf32, #tpu.memory_space<vmem>>, %arg4: memref<2x128xf32, #tpu.memory_space<vmem>>) attributes {dimension_semantics = [#tpu.dimension_semantics<parallel>, #tpu.dimension_semantics<arbitrary>], iteration_bounds = array<i64: 1, 2>, scalar_prefetch = 0 : i64, scratch_operands = 1 : i64, tpu.core_type = #tpu.core_type<tc>, window_params = [{transform_indices = @transform_0, window_bounds = array<i64: 1, 2, 128>}, {transform_indices = @transform_1, window_bounds = array<i64: 1, 2, 128>}]} {
    %c0_i32 = arith.constant 0 : i32
    %0 = arith.cmpi eq, %arg1, %c0_i32 : i32
    %1 = arith.extui %0 : i1 to i32
    %c0_i32_0 = arith.constant 0 : i32
    %2 = arith.cmpi ne, %1, %c0_i32_0 : i32
    scf.if %2 {
      %c2_i32 = arith.constant 2 : i32
      %10 = arith.muli %arg0, %c2_i32 : i32
      %11 = tpu.iota {dimensions = array<i32: 0>} : vector<2x128xi32>
      %12 = tpu.iota {dimensions = array<i32: 1>} : vector<1x128xi32>
      %c31_i32 = arith.constant 31 : i32
      %13 = vector.broadcast %c31_i32 : i32 to vector<1x128xi32>
      %14 = arith.andi %12, %13 : vector<1x128xi32>
      %c5_i32 = arith.constant 5 : i32
      %15 = vector.broadcast %c5_i32 : i32 to vector<1x128xi32>
      %16 = arith.shrsi %12, %15 : vector<1x128xi32>
      %17 = vector.broadcast %10 : i32 to vector<2x128xi32>
      %18 = arith.addi %17, %11 : vector<2x128xi32>
      %c4_i32 = arith.constant 4 : i32
      %19 = vector.broadcast %c4_i32 : i32 to vector<2x128xi32>
      %20 = arith.muli %18, %19 : vector<2x128xi32>
      %21 = vector.broadcast %16 : vector<1x128xi32> to vector<2x128xi32>
      %22 = arith.addi %20, %21 : vector<2x128xi32>
      %23 = arith.sitofp %22 : vector<2x128xi32> to vector<2x128xf32>
      %c1_i32 = arith.constant 1 : i32
      %24 = vector.broadcast %c1_i32 : i32 to vector<1x128xi32>
      %25 = arith.shrsi %14, %24 : vector<1x128xi32>
      %26 = arith.sitofp %25 : vector<1x128xi32> to vector<1x128xf32>
      %cst = arith.constant -0.575646281 : f32
      %27 = vector.broadcast %cst : f32 to vector<1x128xf32>
      %28 = arith.mulf %26, %27 : vector<1x128xf32>
      %29 = math.exp %28 : vector<1x128xf32>
      %c1_i32_8 = arith.constant 1 : i32
      %30 = vector.broadcast %c1_i32_8 : i32 to vector<1x128xi32>
      %31 = arith.andi %14, %30 : vector<1x128xi32>
      %c0_i32_9 = arith.constant 0 : i32
      %32 = vector.broadcast %c0_i32_9 : i32 to vector<1x128xi32>
      %33 = arith.cmpi eq, %31, %32 : vector<1x128xi32>
      %cst_10 = arith.constant 0.000000e+00 : f32
      %cst_11 = arith.constant 1.57079637 : f32
      %34 = vector.broadcast %cst_10 : f32 to vector<1x128xf32>
      %35 = vector.broadcast %cst_11 : f32 to vector<1x128xf32>
      %36 = arith.select %33, %34, %35 : vector<1x128xi1>, vector<1x128xf32>
      %cst_12 = arith.constant 0.000000e+00 : f32
      %37 = vector.broadcast %cst_12 : f32 to vector<2x128xf32>
      %38 = arith.addf %23, %37 : vector<2x128xf32>
      %39 = vector.broadcast %29 : vector<1x128xf32> to vector<2x128xf32>
      %40 = arith.mulf %38, %39 : vector<2x128xf32>
      %41 = vector.broadcast %36 : vector<1x128xf32> to vector<2x128xf32>
      %42 = arith.addf %40, %41 : vector<2x128xf32>
      %43 = math.sin %42 : vector<2x128xf32>
      %c0_13 = arith.constant 0 : index
      %c0_14 = arith.constant 0 : index
      %44 = vector.load %arg4[%c0_13, %c0_14] : memref<2x128xf32, #tpu.memory_space<vmem>>, vector<2x128xf32>
      tpu.vector_store %arg4[%c0_13, %c0_14], %43 {strides = array<i32>} : memref<2x128xf32, #tpu.memory_space<vmem>>, vector<2x128xf32>,
    } else {
    }
    %c0 = arith.constant 0 : index
    %c0_1 = arith.constant 0 : index
    %c0_2 = arith.constant 0 : index
    %3 = vector.load %arg2[%c0, %c0_1, %c0_2] : memref<1x2x128xf32, #tpu.memory_space<vmem>>, vector<1x2x128xf32>
    %4 = vector.shape_cast %3 : vector<1x2x128xf32> to vector<2x128xf32>
    %c0_3 = arith.constant 0 : index
    %c0_4 = arith.constant 0 : index
    %5 = vector.load %arg4[%c0_3, %c0_4] : memref<2x128xf32, #tpu.memory_space<vmem>>, vector<2x128xf32>
    %6 = arith.addf %4, %5 : vector<2x128xf32>
    %c0_5 = arith.constant 0 : index
    %c0_6 = arith.constant 0 : index
    %c0_7 = arith.constant 0 : index
    %7 = vector.load %arg3[%c0_5, %c0_6, %c0_7] : memref<1x2x128xf32, #tpu.memory_space<vmem>>, vector<1x2x128xf32>
    %8 = vector.shape_cast %7 : vector<1x2x128xf32> to vector<2x128xf32>
    %9 = vector.shape_cast %6 : vector<2x128xf32> to vector<1x2x128xf32>
    tpu.vector_store %arg3[%c0_5, %c0_6, %c0_7], %9 {strides = array<i32>} : memref<1x2x128xf32, #tpu.memory_space<vmem>>, vector<1x2x128xf32>,
    return
  }
  func.func @transform_0(%arg0: i32, %arg1: i32) -> (i32, i32, i32) {
    %c0_i32 = arith.constant 0 : i32
    %c0_i32_0 = arith.constant 0 : i32
    return %arg1, %arg0, %c0_i32 : i32, i32, i32
  }
  func.func @transform_1(%arg0: i32, %arg1: i32) -> (i32, i32, i32) {
    %c0_i32 = arith.constant 0 : i32
    %c0_i32_0 = arith.constant 0 : i32
    return %arg1, %arg0, %c0_i32 : i32, i32, i32
  }
}

</mosaic_0001>

<llo_original>
// kernel: tpu_custom_call.1
$region0: #{tpu_custom_call.1}
  #allocation0 [shape = 'u32[]', space=smem, size = 0x4, offset = 0x4, fixed_abs, tag = 'smem constant byte address 0x4 - core index']
  #allocation1 [shape = 'u32[144,128]{1,0:T(1,128)}', space=vmem, size = 0x12000, scoped, tag = 'internal scratch']
  #allocation2 [shape = 'f32[2,128]{1,0:T(2,128)}', space=vmem, size = 0x400, scoped, tag = 'scratch operand']
  %s0 = inlined_call_operand.hbm [shape: f32[2,2,128], index: 0, kind: input, shape index: {}]
  %s1 = inlined_call_operand.hbm [shape: f32[2,2,128], index: 1, kind: output, shape index: {}]
  %s2 = sld [smem:[#allocation0]]
  $region45: #{tpu_custom_call.1} parent=0
    _
  %s4 = ssub.s32 1, %s2
  %s5 = scalar_select 0, %s4, %s2
  $region1: #{tpu_custom_call.1} parent=0
    #allocation3 [shape = 'u8[2048]{0}', space=vmem, size = 0x800, scoped, tag = 'input window, operand 0']
    #allocation4 [shape = 's32[2]{0}', space=sflag, size = 0x8, scoped, tag = 'scoped memory for tpu_custom_call.1']
    #allocation5 [shape = 's32[2]{0}', space=sflag, size = 0x8, scoped, tag = 'scoped memory for tpu_custom_call.1']
    #allocation6 [shape = 'u8[2048]{0}', space=vmem, size = 0x800, scoped, tag = 'output window, operand 0']
    %6 = vsyncpa [#allocation4], 0
    %s7 = scalar_lea.sflag [#allocation4], 1
    %8 = vsyncpa %s7, 0
    %9 = vsyncpa [#allocation5], 0
    %s10 = scalar_lea.sflag [#allocation5], 1
    %11 = vsyncpa %s10, 0
    loop: start=0, step=1, limit=4
    $region2: #{tpu_custom_call.1} parent=1 // loop_pre_header
      _
    $region3: #{tpu_custom_call.1} parent=1 // loop_header
      %s13 = sphi 0, %s17
      %p14 = scmp.ge.s32.totalorder %s13, 4
      %s20 = sphi 0, %s32
      %s21 = sphi 0, %s28
      %s22 = sphi 0, %s20
      %s23 = sphi 0, %s21
      %s24 = sphi 0, %s22
      %s25 = sphi 0, %s23
      %s37 = sphi 0, %s39
      %s40 = sphi 0, %s37
      %s41 = sphi 0, %s40
      %s57 = sphi 0, %s41
      %s65 = sphi 0, %s67
      %s68 = sphi 0, %s65
      %s69 = sphi 0, %s68
      %s85 = sphi 0, %s69
    $region4: #{tpu_custom_call.1} parent=1 // loop_header_branch
      %16 = sbr.rel (%p14) target = $region8
    $region5: #{tpu_custom_call.1} parent=1 // loop_body
      %s18 = ssub.s32 %s13, 1
      %s19 = ssub.s32 %s13, 2
      %s26 = sadd.s32 1, %s21
      %p27 = scmp.ge.s32.totalorder %s26, 2
      %s28 = scalar_select %p27, 0, %s26
      %s29 = sadd.s32 1, %s20
      %s30 = scalar_select %p27, %s29, %s20
      %p31 = scmp.ge.s32.totalorder %s30, 1
      %s32 = scalar_select %p31, 0, %s30
      %s33 = ssub.s32 %s21, %s28
      %s34 = ssub.s32 %s20, %s32
      %s35 = sor.u32 %s33, %s34
      %p36 = scmp.eq.s32.totalorder %s35, 0
      %s38 = sadd.s32 %s37, 1
      %s39 = scalar_select %p36, %s37, %s38
      %p42 = pneg %p36
      %p43 = scmp.eq.s32.totalorder %s13, 1
      %p44 = por %p42, %p43
      %p45 = scmp.ne.s32.totalorder %s37, %s40
      %p46 = scmp.eq.s32.totalorder %s13, 0
      %p47 = por %p45, %p46
      %p48 = scmp.ne.s32.totalorder %s37, %s40
      %p49 = scmp.eq.s32.totalorder %s18, 1
      %p50 = por %p48, %p49
      %p51 = scmp.ne.s32.totalorder %s40, %s41
      %p52 = scmp.eq.s32.totalorder %s18, 0
      %p53 = por %p51, %p52
      %p54 = scmp.ne.s32.totalorder %s40, %s41
      %p55 = scmp.eq.s32.totalorder %s19, 1
      %p56 = por %p54, %p55
      %p58 = scmp.ne.s32.totalorder %s41, %s57
      %p59 = scmp.eq.s32.totalorder %s19, 0
      %p60 = por %p58, %p59
      %s61 = ssub.s32 %s21, %s28
      %s62 = ssub.s32 %s20, %s32
      %s63 = sor.u32 %s61, %s62
      %p64 = scmp.eq.s32.totalorder %s63, 0
      %s66 = sadd.s32 %s65, 1
      %s67 = scalar_select %p64, %s65, %s66
      %p70 = pneg %p64
      %p71 = scmp.eq.s32.totalorder %s13, 1
      %p72 = por %p70, %p71
      %p73 = scmp.ne.s32.totalorder %s65, %s68
      %p74 = scmp.eq.s32.totalorder %s13, 0
      %p75 = por %p73, %p74
      %p76 = scmp.ne.s32.totalorder %s65, %s68
      %p77 = scmp.eq.s32.totalorder %s18, 1
      %p78 = por %p76, %p77
      %p79 = scmp.ne.s32.totalorder %s68, %s69
      %p80 = scmp.eq.s32.totalorder %s18, 0
      %p81 = por %p79, %p80
      %p82 = scmp.ne.s32.totalorder %s68, %s69
      %p83 = scmp.eq.s32.totalorder %s19, 1
      %p84 = por %p82, %p83
      %p86 = scmp.ne.s32.totalorder %s69, %s85
      %p87 = scmp.eq.s32.totalorder %s19, 0
      %p88 = por %p86, %p87
      %p89 = scmp.le.s32.totalorder 1, %s13
      %p90 = scmp.lt.s32.totalorder %s13, 3
      %p91 = pnand %p89, %p90
      %p92 = pneg %p91
      // Predicated region
      $region9: #{tpu_custom_call.1} parent=5 // pred_check
        _
      $region10: #{tpu_custom_call.1} parent=5 // pred_check_branch
        %94 = sbr.rel (%p91) target = $region12
      $region11: #{tpu_custom_call.1} parent=5 // pred_region
        %s95 = ssub.s32 %s13, 1
      $region12: #{tpu_custom_call.1} parent=5 // pred_fallthru
        _
      %p96 = scmp.lt.s32.totalorder %s13, 2
      // Predicated region
      $region13: #{tpu_custom_call.1} parent=5 // pred_check
        %p97 = pneg %p96
      $region14: #{tpu_custom_call.1} parent=5 // pred_check_branch
        %99 = sbr.rel (%p97) target = $region16
      $region15: #{tpu_custom_call.1} parent=5 // pred_region
        // Predicated region
        $region17: #{tpu_custom_call.1} parent=15 // pred_check
          %p100 = pneg %p47
        $region18: #{tpu_custom_call.1} parent=15 // pred_check_branch
          %102 = sbr.rel (%p100) target = $region20
        $region19: #{tpu_custom_call.1} parent=15 // pred_region
          %s103 = sand.u32 %s37, 1
          %s104 = scalar_lea.sflag [#allocation4], %s103
          %s105 = sand.u32 %s37, 1
          %s106 = smul.addr %s105, 2
          %s107 = scalar_lea.vmem [#allocation3], %s106
          %s109 = ssub.s32 32, 32
          %110 = vsyncadd %s104, %s109
          %s111 = sadd.s32 %s20, %s21
          %s112 = smul.addr %s111, 32
          %s113 = scalar_lea.hbm %s0, %s112
          %s115 = sshll.u32 %s107, 4
          %s116 = int_to_ptr.vmem [resolvable:$true] %s115
          %118 = dma.hbm_to_vmem [thread:$0]  %s113, 32, %s116, %s104
        $region20: #{tpu_custom_call.1} parent=15 // pred_fallthru
          _
      $region16: #{tpu_custom_call.1} parent=5 // pred_fallthru
        _
      %p119 = scmp.le.s32.totalorder 1, %s13
      %p120 = scmp.lt.s32.totalorder %s13, 3
      %p121 = pnand %p119, %p120
      %p122 = pneg %p121
      // Predicated region
      $region21: #{tpu_custom_call.1} parent=5 // pred_check
        _
      $region22: #{tpu_custom_call.1} parent=5 // pred_check_branch
        %124 = sbr.rel (%p121) target = $region24
      $region23: #{tpu_custom_call.1} parent=5 // pred_region
        %s125 = ssub.s32 %s13, 1
        %s126 = sand.u32 %s40, 1
        %s127 = scalar_lea.sflag [#allocation4], %s126
        %s128 = sand.u32 %s40, 1
        %s129 = smul.addr %s128, 2
        %s130 = scalar_lea.vmem [#allocation3], %s129
        // Predicated region
        $region25: #{tpu_custom_call.1} parent=23 // pred_check
          %p131 = pneg %p53
        $region26: #{tpu_custom_call.1} parent=23 // pred_check_branch
          %133 = sbr.rel (%p131) target = $region28
        $region27: #{tpu_custom_call.1} parent=23 // pred_region
          %134 = dma.done %s127, 32
        $region28: #{tpu_custom_call.1} parent=23 // pred_fallthru
          _
        %s135 = sand.u32 %s40, 1
        %s136 = scalar_lea.sflag [#allocation4], %s135
        %s137 = sand.u32 %s40, 1
        %s138 = smul.addr %s137, 2
        %s139 = scalar_lea.vmem [#allocation3], %s138
        %p140 = pneg %p53
        %p141 = pneg %p50
        %p142 = pneg %p81
        %p143 = pneg %p78
        %s144 = sand.u32 %s68, 1
        %s145 = scalar_lea.sflag [#allocation5], %s144
        %s146 = sand.u32 %s68, 1
        %s147 = smul.addr %s146, 2
        %s148 = scalar_lea.vmem [#allocation6], %s147
        %p149 = scmp.eq.s32.totalorder %s23, 0
        // Predicated region
        $region29: #{tpu_custom_call.1} parent=23 // pred_check
          %p150 = pneg %p149
        $region30: #{tpu_custom_call.1} parent=23 // pred_check_branch
          %152 = sbr.rel (%p150) target = $region32
        $region31: #{tpu_custom_call.1} parent=23 // pred_region
          %s153 = smul.u32 %s22, 2
          %v154 = vlaneseq
          %v155 = vshrl.u32 %v154, 7
          %v156 = vlaneseq
          %v157 = vand.u32 %v156, 127
          %v158 = vand.u32 %v157, 31
          %v159 = vshra.s32 %v157, 5
          %v160 = vstv %s153
          %v161 = vadd.s32 %v160, %v155
          %v162 = vmul.u32 %v161, 4
          %v163 = vadd.s32 %v162, %v159
          %v164 = vcvt.s32.f32 %v163
          %v165 = vshra.s32 %v158, 1
          %v166 = vcvt.s32.f32 %v165
          %v167 = vmul.f32 %v166, -0.5756463
          %v168 = vmul.f32 %v167, 1.442695
          %v169 = vpow.pop %v168
          %v170 = vand.u32 %v158, 1
          %vm171 = vcmp.eq.s32.totalorder %v170, 0
          %v172 = vsel %vm171, 0.0, 1.5707964
          %v173 = vadd.f32 %v164, 0.0
          %v174 = vmul.f32 %v173, %v169
          %v175 = vadd.f32 %v174, %v172
          %v176 = vand.u32 2147483647, %v175
          %vm177 = vcmp.le.f32.partialorder %v176, 0.7853982
          %vm178 = vcmp.lt.s32.totalorder %v175, 0
          %v179 = vand.u32 %v175, 2139095040
          %v180 = vshrl.u32 %v179, 23
          %v181 = vsub.s32 %v180, 127
          %v182 = vand.u32 2147483647, %v175
          %v183 = vand.u32 %v182, 8388607
          %v184 = vor.u32 %v183, 8388608
          %v185 = vsub.s32 0, %v184
          %v186 = vadd.s32 %v181, 1
          %vm187 = vcmp.gt.s32.totalorder %v186, 0
          %v188 = vsel %vm187, %v186, 0
          %v189 = vshrl.u32 %v188, 5
          %v190 = vand.u32 %v188, 31
          %v191 = vsub.s32 32, %v190
          %v192 = vshrl.u32 683565275, %v191
          %v193 = vshll.u32 683565275, %v190
          %v194 = vshrl.u32 2475754826, %v191
          %v195 = vor.u32 %v193, %v194
          %v196 = vshll.u32 2475754826, %v190
          %v197 = vshrl.u32 2131351028, %v191
          %v198 = vor.u32 %v196, %v197
          %v199 = vshll.u32 2131351028, %v190
          %v200 = vshrl.u32 2102212464, %v191
          %v201 = vor.u32 %v199, %v200
          %v202 = vshll.u32 2102212464, %v190
          %v203 = vshrl.u32 920167782, %v191
          %v204 = vor.u32 %v202, %v203
          %v205 = vshll.u32 920167782, %v190
          %v206 = vshrl.u32 1326507024, %v191
          %v207 = vor.u32 %v205, %v206
          %vm208 = vcmp.lt.s32.totalorder %v189, 1
          %vm209 = vcmp.lt.s32.totalorder %v189, 2
          %vm210 = vcmp.lt.s32.totalorder %v189, 3
          %vm211 = vcmp.lt.s32.totalorder %v189, 4
          %v212 = vsel %vm208, %v192, %v195
          %v213 = vsel %vm211, %v201, 2102212464
          %v214 = vsel %vm210, %v198, %v213
          %v215 = vsel %vm209, %v212, %v214
          %v216 = vsel %vm208, %v195, %v198
          %v217 = vsel %vm211, %v204, 920167782
          %v218 = vsel %vm210, %v201, %v217
          %v219 = vsel %vm209, %v216, %v218
          %v220 = vsel %vm208, %v198, %v201
          %v221 = vsel %vm211, %v207, 1326507024
          %v222 = vsel %vm210, %v204, %v221
          %v223 = vsel %vm209, %v220, %v222
          %v224 = vshll.u32 %v184, 8
          %v225 = vmul.u32.u64.compose %v224, %v223
          %v226 = vextract.low.u32 %v225
          %v227 = vextract.high.u32 %v225
          %v228 = vmul.u32.u64.compose %v224, %v219
          %v229 = vextract.low.u32 %v228
          %v230 = vextract.high.u32 %v228
          %v231 = vmul.u32 %v224, %v215
          %v232 = vadd.s32 %v227, %v229
          %vm233 = vc.u32 %v227, %v229
          %v234 = vadd.s32 %v230, 1
          %v235 = vsel %vm233, %v234, %v230
          %v236 = vadd.s32 %v231, %v235
          %v237 = vadd.s32 %v236, 536870912
          %v238 = vshrl.u32 %v237, 30
          %v239 = vshll.u32 %v238, 30
          %v240 = vsub.s32 %v236, %v239
          %vm241 = vcmp.lt.s32.totalorder %v240, 0
          %v242 = vsub.s32 0, %v240
          %v243 = vsel %vm241, %v242, %v240
          %v244 = vclz %v243
          %v245 = vsub.s32 %v244, 2
          %vm246 = vcmp.gt.s32.totalorder 0, %v245
          %v247 = vsel %vm246, 0, %v245
          %v248 = vsub.s32 32, %v247
          %v249 = vshll.u32 %v240, %v247
          %v250 = vshrl.u32 %v232, %v248
          %v251 = vor.u32 %v249, %v250
          %v252 = vsub.s32 4294967266, %v247
          %v253 = vadd.s32 %v252, 127
          %v254 = vshll.u32 %v253, 23
          %v255 = vor.u32 4788187, %v254
          %v256 = vand.u32 2147483647, %v255
          %v258 = vcvt.s32.f32 %v251
          %v259 = vmul.f32 %v258, %v256
          %v260 = vxor.u32 %v259, 2147483648
          %v261 = vsel %vm178, %v260, %v259
          %v262 = vsub.s32 4, %v238
          %v263 = vsel %vm178, %v262, %v238
          %v264 = vsel %vm177, %v175, %v261
          %v265 = vsel %vm177, 0, %v263
          %v266 = vcosq.f32.pop %v264
          %v267 = vsinq.f32.pop %v264
          %vm268 = vweird.f32 %v175
          %v269 = vadd.s32 %v265, 3
          %v270 = vand.u32 %v269, 3
          %vm271 = vcmp.lt.s32.totalorder %v270, 2
          %vm272 = vcmp.eq.s32.totalorder %v270, 0
          %v273 = vxor.u32 %v267, 2147483648
          %v274 = vsel %vm272, %v266, %v273
          %vm275 = vcmp.eq.s32.totalorder %v270, 2
          %v276 = vxor.u32 %v266, 2147483648
          %v277 = vsel %vm275, %v276, %v267
          %v278 = vsel %vm271, %v274, %v277
          %v279 = vsel %vm268, nan, %v278
          %280 = vst [vmem:[#allocation2] sm:$0x3] %v279
        $region32: #{tpu_custom_call.1} parent=23 // pred_fallthru
          _
        %v281 = vld [vmem:[%s130] sm:$0x3]
        %v282 = vld [vmem:[#allocation2] sm:$0x3]
        %v283 = vadd.f32 %v281, %v282
        %284 = vst [vmem:[%s148] sm:$0x3] %v283
        %s285 = sand.u32 %s68, 1
        %s286 = scalar_lea.sflag [#allocation5], %s285
        %s287 = sand.u32 %s68, 1
        %s288 = smul.addr %s287, 2
        %s289 = scalar_lea.vmem [#allocation6], %s288
        // Predicated region
        $region33: #{tpu_custom_call.1} parent=23 // pred_check
          %p290 = pneg %p78
        $region34: #{tpu_custom_call.1} parent=23 // pred_check_branch
          %292 = sbr.rel (%p290) target = $region36
        $region35: #{tpu_custom_call.1} parent=23 // pred_region
          %s294 = ssub.s32 32, 32
          %295 = vsyncadd %s286, %s294
          %s296 = sadd.s32 %s22, %s23
          %s297 = smul.addr %s296, 32
          %s298 = scalar_lea.hbm %s1, %s297
          %s300 = sshll.u32 %s289, 4
          %s301 = int_to_ptr.vmem [resolvable:$true] %s300
          %303 = dma.vmem_to_hbm [thread:$0]  %s301, 32, %s298, %s286
        $region36: #{tpu_custom_call.1} parent=23 // pred_fallthru
          _
      $region24: #{tpu_custom_call.1} parent=5 // pred_fallthru
        _
      %p304 = scmp.le.s32.totalorder 2, %s13
      // Predicated region
      $region37: #{tpu_custom_call.1} parent=5 // pred_check
        %p305 = pneg %p304
      $region38: #{tpu_custom_call.1} parent=5 // pred_check_branch
        %307 = sbr.rel (%p305) target = $region40
      $region39: #{tpu_custom_call.1} parent=5 // pred_region
        %s308 = ssub.s32 %s13, 2
        // Predicated region
        $region41: #{tpu_custom_call.1} parent=39 // pred_check
          %p309 = pneg %p84
        $region42: #{tpu_custom_call.1} parent=39 // pred_check_branch
          %311 = sbr.rel (%p309) target = $region44
        $region43: #{tpu_custom_call.1} parent=39 // pred_region
          %s312 = sand.u32 %s69, 1
          %s313 = scalar_lea.sflag [#allocation5], %s312
          %s314 = sand.u32 %s69, 1
          %s315 = smul.addr %s314, 2
          %s316 = scalar_lea.vmem [#allocation6], %s315
          %317 = dma.done %s313, 32
        $region44: #{tpu_custom_call.1} parent=39 // pred_fallthru
          _
      $region40: #{tpu_custom_call.1} parent=5 // pred_fallthru
        _
    $region6: #{tpu_custom_call.1} parent=1 // loop_footer
      %s17 = sadd.s32 1, %s13
    $region7: #{tpu_custom_call.1} parent=1 // loop_footer_branch
      %12 = sbr.rel target = $region3
    $region8: #{tpu_custom_call.1} parent=1 // loop_exit
      _
    %318 = vsyncpa [#allocation4], 1
    %s319 = scalar_lea.sflag [#allocation4], 1
    %320 = vsyncpa %s319, 1
    %321 = vsyncpa [#allocation5], 1
    %s322 = scalar_lea.sflag [#allocation5], 1
    %323 = vsyncpa %s322, 1

</llo_original>
